<compile_context>
chip_gen: v6e
topology: v6e:2x2x1
jax: 0.10.0
libtpu: 0.0.40
codegen_flags: <defaults>
</compile_context>

<pallas_src>
import jax
import jax.numpy as jnp
from jax.experimental import pallas as pl
from jax.experimental.pallas import tpu as pltpu


def _round_up(x, m):
    return ((x + m - 1) // m) * m


def _soft_ce_kernel(logits_ref, targets_ref, loss_ref):
    # logits_ref / targets_ref: (block_n, C) VMEM tiles (any float dtype in
    # HBM); all arithmetic is done in f32.
    x = logits_ref[...].astype(jnp.float32)
    t = targets_ref[...].astype(jnp.float32)

    # numerically stable log-sum-exp along the class axis (axis=1)
    m = jnp.max(x, axis=1, keepdims=True)                       # (block_n, 1)
    z = x - m
    lse = jnp.log(jnp.sum(jnp.exp(z), axis=1, keepdims=True))   # (block_n, 1)

    # fused per-sample loss:
    #   sum_c (lse - z) * t  ==  lse * sum_c(t) - sum_c(t * z)
    # avoids a (block_n, C) nll temporary; zero-padded rows (t == 0) give 0.
    t_sum = jnp.sum(t, axis=1, keepdims=True)                   # (block_n, 1)
    tz_sum = jnp.sum(t * z, axis=1, keepdims=True)              # (block_n, 1)
    loss_ref[...] = lse * t_sum - tz_sum


def _choose_block_n(N, C, itemsizes):
    # sublane multiple of the narrowest input dtype: 8 (f32) / 16 (bf16) / 32 (8-bit)
    row_mult = max(8, 32 // min(itemsizes))
    # class axis is lane-padded to a multiple of 128 in VMEM
    c_pad = _round_up(C, 128)
    bytes_per_row = c_pad * sum(itemsizes)                  # both input tiles
    # ~4 MiB of input tiles per grid step; with the default 2-deep double
    # buffering that is ~8 MiB of DMA buffers + f32 temporaries, comfortably
    # inside the 48 MiB scoped VMEM on v5e / v6e / v7x.
    tile_budget = 4 * 1024 * 1024
    rows_by_vmem = max(row_mult,
                       (tile_budget // bytes_per_row) // row_mult * row_mult)
    # aim for >= ~8 pipelined grid steps on large problems (DMA/compute
    # overlap; >= 2 steps lets v7x shard the row axis over both TensorCores).
    rows_by_steps = max(row_mult, _round_up(-(-N // 8), row_mult))
    return max(row_mult,
               min(rows_by_vmem, rows_by_steps, _round_up(N, row_mult)))


def soft_cross_entropy(inputs, targets, reduce=True, block_n=None,
                       vmem_limit_bytes=48 * 1024 * 1024):
    """Pallas equivalent of softCrossEntropy.forward.

    inputs, targets: (N, C) float arrays (f32 or bf16; bf16 halves HBM read
    traffic, math inside the kernel is always f32).
    Returns a scalar (reduce=True) or an (N,) vector (reduce=False), float32.
    """
    N, C = inputs.shape
    assert targets.shape == (N, C)

    itemsizes = (jnp.dtype(inputs.dtype).itemsize,
                 jnp.dtype(targets.dtype).itemsize)
    row_mult = max(8, 32 // min(itemsizes))

    if block_n is None:
        block_n = _choose_block_n(N, C, itemsizes)
    else:
        block_n = max(row_mult, _round_up(block_n, row_mult))

    # Pad the row axis so the grid covers N exactly. Padded rows (targets == 0)
    # yield exactly-zero loss in the fused kernel and are sliced off below.
    N_pad = _round_up(N, block_n)
    if N_pad != N:
        inputs = jnp.pad(inputs, ((0, N_pad - N), (0, 0)))
        targets = jnp.pad(targets, ((0, N_pad - N), (0, 0)))

    per_sample = pl.pallas_call(
        _soft_ce_kernel,
        out_shape=jax.ShapeDtypeStruct((N_pad, 1), jnp.float32),
        grid_spec=pltpu.PrefetchScalarGridSpec(
            num_scalar_prefetch=0,
            grid=(N_pad // block_n,),
            in_specs=[
                pl.BlockSpec((block_n, C), lambda i: (i, 0)),
                pl.BlockSpec((block_n, C), lambda i: (i, 0)),
            ],
            out_specs=pl.BlockSpec((block_n, 1), lambda i: (i, 0)),
        ),
        compiler_params=pltpu.CompilerParams(
            dimension_semantics=("parallel",),
            vmem_limit_bytes=vmem_limit_bytes,
        ),
    )(inputs, targets)

    per_sample = per_sample[:N, 0]  # (N,)
    if reduce:
        # torch: sum over all elements / sample_num
        return jnp.sum(per_sample) * (1.0 / N)
    return per_sample


def _reference(inputs, targets, reduce=True):
    logp = jax.nn.log_softmax(inputs.astype(jnp.float32), axis=1)
    per_sample = jnp.sum(-logp * targets.astype(jnp.float32), axis=1)
    if reduce:
        return jnp.sum(per_sample) / inputs.shape[0]
    return per_sample


if __name__ == "__main__":
    key = jax.random.PRNGKey(0)
    k1, k2, k3, k4 = jax.random.split(key, 4)

    # small shapes consistent with (sample_num, class_num)
    N, C = 8, 32
    logits = jax.random.normal(k1, (N, C), dtype=jnp.float32)
    # soft target labels (rows sum to 1), "vector form" targets
    targets = jax.nn.softmax(jax.random.normal(k2, (N, C), dtype=jnp.float32), axis=1)

    loss_reduced = soft_cross_entropy(logits, targets, reduce=True)
    loss_per_sample = soft_cross_entropy(logits, targets, reduce=False)

    # non-multiple N exercises the zero-padded final tile
    N2, C2 = 37, 10
    logits2 = jax.random.normal(k3, (N2, C2), dtype=jnp.float32)
    targets2 = jax.nn.softmax(jax.random.normal(k4, (N2, C2), dtype=jnp.float32), axis=1)
    loss2_reduced = soft_cross_entropy(logits2, targets2, reduce=True)
    loss2_per_sample = soft_cross_entropy(logits2, targets2, reduce=False)

    # bf16 HBM inputs (halved read traffic), f32 in-kernel math
    logits_bf16 = logits.astype(jnp.bfloat16)
    targets_bf16 = targets.astype(jnp.bfloat16)
    loss_bf16 = soft_cross_entropy(logits_bf16, targets_bf16, reduce=True)

    jax.block_until_ready(
        (loss_reduced, loss_per_sample, loss2_reduced, loss2_per_sample, loss_bf16))

    ref_reduced = _reference(logits, targets, reduce=True)
    ref_per_sample = _reference(logits, targets, reduce=False)
    ref2_reduced = _reference(logits2, targets2, reduce=True)
    ref2_per_sample = _reference(logits2, targets2, reduce=False)
    ref_bf16 = _reference(logits_bf16.astype(jnp.float32),
                          targets_bf16.astype(jnp.float32), reduce=True)

    assert jnp.allclose(loss_reduced, ref_reduced, atol=1e-5, rtol=1e-5)
    assert jnp.allclose(loss_per_sample, ref_per_sample, atol=1e-5, rtol=1e-5)
    assert jnp.allclose(loss2_reduced, ref2_reduced, atol=1e-5, rtol=1e-5)
    assert jnp.allclose(loss2_per_sample, ref2_per_sample, atol=1e-5, rtol=1e-5)
    assert jnp.allclose(loss_bf16, ref_bf16, atol=1e-4, rtol=1e-4)

    print("KERNEL_OK")
</pallas_src>

<mosaic_0001>
module attributes {stable_mosaic.version = 11 : i64} {
  func.func @_soft_ce_kernel(%arg0: i32, %arg1: memref<8x32xf32, #tpu.memory_space<vmem>>, %arg2: memref<8x32xf32, #tpu.memory_space<vmem>>, %arg3: memref<8x1xf32, #tpu.memory_space<vmem>>) attributes {dimension_semantics = [#tpu.dimension_semantics<parallel>], iteration_bounds = array<i64: 1>, scalar_prefetch = 0 : i64, scratch_operands = 0 : i64, tpu.core_type = #tpu.core_type<tc>, window_params = [{transform_indices = @transform_0, window_bounds = array<i64: 8, 32>}, {transform_indices = @transform_1, window_bounds = array<i64: 8, 32>}, {transform_indices = @transform_2, window_bounds = array<i64: 8, 1>}]} {
    %c0 = arith.constant 0 : index
    %c0_0 = arith.constant 0 : index
    %0 = vector.load %arg1[%c0, %c0_0] : memref<8x32xf32, #tpu.memory_space<vmem>>, vector<8x32xf32>
    %c0_1 = arith.constant 0 : index
    %c0_2 = arith.constant 0 : index
    %1 = vector.load %arg2[%c0_1, %c0_2] : memref<8x32xf32, #tpu.memory_space<vmem>>, vector<8x32xf32>
    %cst = arith.constant dense<0xFF800000> : vector<8xf32>
    %2 = vector.multi_reduction <maximumf>, %0, %cst [1] : vector<8x32xf32> to vector<8xf32>
    %3 = vector.shape_cast %2 : vector<8xf32> to vector<8x1xf32>
    %4 = vector.broadcast %3 : vector<8x1xf32> to vector<8x32xf32>
    %5 = arith.subf %0, %4 : vector<8x32xf32>
    %6 = math.exp %5 : vector<8x32xf32>
    %cst_3 = arith.constant dense<0.000000e+00> : vector<8xf32>
    %7 = vector.multi_reduction <add>, %6, %cst_3 [1] : vector<8x32xf32> to vector<8xf32>
    %8 = vector.shape_cast %7 : vector<8xf32> to vector<8x1xf32>
    %9 = math.log %8 : vector<8x1xf32>
    %cst_4 = arith.constant dense<0.000000e+00> : vector<8xf32>
    %10 = vector.multi_reduction <add>, %1, %cst_4 [1] : vector<8x32xf32> to vector<8xf32>
    %11 = vector.shape_cast %10 : vector<8xf32> to vector<8x1xf32>
    %12 = arith.mulf %1, %5 : vector<8x32xf32>
    %cst_5 = arith.constant dense<0.000000e+00> : vector<8xf32>
    %13 = vector.multi_reduction <add>, %12, %cst_5 [1] : vector<8x32xf32> to vector<8xf32>
    %14 = vector.shape_cast %13 : vector<8xf32> to vector<8x1xf32>
    %15 = arith.mulf %9, %11 : vector<8x1xf32>
    %16 = arith.subf %15, %14 : vector<8x1xf32>
    %c0_6 = arith.constant 0 : index
    %c0_7 = arith.constant 0 : index
    %17 = vector.load %arg3[%c0_6, %c0_7] : memref<8x1xf32, #tpu.memory_space<vmem>>, vector<8x1xf32>
    tpu.vector_store %arg3[%c0_6, %c0_7], %16 {strides = array<i32>} : memref<8x1xf32, #tpu.memory_space<vmem>>, vector<8x1xf32>,
    return
  }
  func.func @transform_0(%arg0: i32) -> (i32, i32) {
    %c0_i32 = arith.constant 0 : i32
    %c0_i32_0 = arith.constant 0 : i32
    return %arg0, %c0_i32 : i32, i32
  }
  func.func @transform_1(%arg0: i32) -> (i32, i32) {
    %c0_i32 = arith.constant 0 : i32
    %c0_i32_0 = arith.constant 0 : i32
    return %arg0, %c0_i32 : i32, i32
  }
  func.func @transform_2(%arg0: i32) -> (i32, i32) {
    %c0_i32 = arith.constant 0 : i32
    %c0_i32_0 = arith.constant 0 : i32
    return %arg0, %c0_i32 : i32, i32
  }
}

</mosaic_0001>

<llo_original>
// kernel: tpu_custom_call.1
$region0: #{tpu_custom_call.1}
  #allocation0 [shape = 'u32[]', space=smem, size = 0x4, offset = 0x4, fixed_abs, tag = 'smem constant byte address 0x4 - core index']
  #allocation1 [shape = 'u32[144,128]{1,0:T(1,128)}', space=vmem, size = 0x12000, scoped, tag = 'internal scratch']
  %s0 = inlined_call_operand.hbm [shape: f32[8,32], index: 0, kind: input, shape index: {}]
  %s1 = inlined_call_operand.hbm [shape: f32[8,32], index: 1, kind: input, shape index: {}]
  %s2 = inlined_call_operand.vmem [shape: f32[8,1], index: 2, kind: output, shape index: {}]
  %s3 = sld [smem:[#allocation0]]
  $region26: #{tpu_custom_call.1} parent=0
    _
  %s5 = ssub.s32 1, %s3
  %s6 = scalar_select 0, %s5, %s3
  $region1: #{tpu_custom_call.1} parent=0
    #allocation2 [shape = 'u8[4096]{0}', space=vmem, size = 0x1000, scoped, tag = 'input window, operand 0, single buffered']
    #allocation3 [shape = 's32[1]{0}', space=sflag, size = 0x4, scoped, tag = 'scoped memory for tpu_custom_call.1']
    #allocation4 [shape = 'u8[4096]{0}', space=vmem, size = 0x1000, scoped, tag = 'input window, operand 1, single buffered']
    #allocation5 [shape = 's32[1]{0}', space=sflag, size = 0x4, scoped, tag = 'scoped memory for tpu_custom_call.1']
    %7 = vsyncpa [#allocation3], 0
    %8 = vsyncpa [#allocation5], 0
    // Predicated region
    $region2: #{tpu_custom_call.1} parent=1 // pred_check
      _
    $region3: #{tpu_custom_call.1} parent=1 // pred_check_branch
      %10 = sbr.rel (0) target = $region5
    $region4: #{tpu_custom_call.1} parent=1 // pred_region
      %s12 = ssub.s32 128, 128
      %13 = vsyncadd [#allocation3], %s12
      %s15 = sshll.u32 [#allocation2], 4
      %s16 = int_to_ptr.vmem [resolvable:$true] %s15
      %18 = dma.hbm_to_vmem [thread:$0]  %s0, 128, %s16, [#allocation3]
    $region5: #{tpu_custom_call.1} parent=1 // pred_fallthru
      _
    // Predicated region
    $region6: #{tpu_custom_call.1} parent=1 // pred_check
      _
    $region7: #{tpu_custom_call.1} parent=1 // pred_check_branch
      %20 = sbr.rel (0) target = $region9
    $region8: #{tpu_custom_call.1} parent=1 // pred_region
      %s22 = ssub.s32 128, 128
      %23 = vsyncadd [#allocation5], %s22
      %s25 = sshll.u32 [#allocation4], 4
      %s26 = int_to_ptr.vmem [resolvable:$true] %s25
      %28 = dma.hbm_to_vmem [thread:$0]  %s1, 128, %s26, [#allocation5]
    $region9: #{tpu_custom_call.1} parent=1 // pred_fallthru
      _
    // Predicated region
    $region10: #{tpu_custom_call.1} parent=1 // pred_check
      _
    $region11: #{tpu_custom_call.1} parent=1 // pred_check_branch
      %30 = sbr.rel (0) target = $region13
    $region12: #{tpu_custom_call.1} parent=1 // pred_region
      %31 = dma.done [#allocation3], 128
    $region13: #{tpu_custom_call.1} parent=1 // pred_fallthru
      _
    // Predicated region
    $region14: #{tpu_custom_call.1} parent=1 // pred_check
      _
    $region15: #{tpu_custom_call.1} parent=1 // pred_check_branch
      %33 = sbr.rel (0) target = $region17
    $region16: #{tpu_custom_call.1} parent=1 // pred_region
      %34 = dma.done [#allocation5], 128
    $region17: #{tpu_custom_call.1} parent=1 // pred_fallthru
      _
    %v35 = vld [vmem:[#allocation2] sm:$0xff]
    %v36 = vld [vmem:[#allocation4] sm:$0xff]
    %vm37 = vcmask 261120
    %v38 = vsel %vm37, %v35, -inf
    %39 = vmax.xlane.f32.xlu0 %v38
    %v40 = vpop.xlane.xlu0 %39
    %v41 = vsub.f32 %v35, %v40
    %v42 = vmul.f32 %v41, 1.442695
    %v43 = vpow.pop %v42
    %v44 = vsel %vm37, %v43, 0.0
    %45 = vadd.xlane.f32.xlu0 %v44
    %v46 = vpop.xlane.xlu0 %45
    %v47 = vlog2.pop %v46
    %v48 = vmul.f32 %v47, 0.6931472
    %v49 = vsel %vm37, %v36, 0.0
    %50 = vadd.xlane.f32.xlu0 %v49
    %v51 = vpop.xlane.xlu0 %50
    %v52 = vmul.f32 %v36, %v41
    %v53 = vsel %vm37, %v52, 0.0
    %54 = vadd.xlane.f32.xlu0 %v53
    %v55 = vpop.xlane.xlu0 %54
    %v56 = vmul.f32 %v48, %v51
    %v57 = vsub.f32 %v56, %v55
    %vm58 = vcmask 7168
    %59 = vst.msk [vmem:[%s2] sm:$0xff] %vm58, %v57
    // Predicated region
    $region18: #{tpu_custom_call.1} parent=1 // pred_check
      _
    $region19: #{tpu_custom_call.1} parent=1 // pred_check_branch
      %61 = sbr.rel (0) target = $region21
    $region20: #{tpu_custom_call.1} parent=1 // pred_region
      _
    $region21: #{tpu_custom_call.1} parent=1 // pred_fallthru
      _
    // Predicated region
    $region22: #{tpu_custom_call.1} parent=1 // pred_check
      _
    $region23: #{tpu_custom_call.1} parent=1 // pred_check_branch
      %63 = sbr.rel (0) target = $region25
    $region24: #{tpu_custom_call.1} parent=1 // pred_region
      _
    $region25: #{tpu_custom_call.1} parent=1 // pred_fallthru
      _
    %64 = vsyncpa [#allocation3], 1
    %65 = vsyncpa [#allocation5], 1

</llo_original>
